<compile_context>
chip_gen: v7x
topology: tpu7x:2x2x1
jax: 0.10.0
libtpu: 0.0.40
codegen_flags: <defaults>
</compile_context>

<pallas_src>
import jax
import jax.numpy as jnp
from jax.experimental import pallas as pl
from jax.experimental.pallas import tpu as pltpu


def _make_rank_loss_kernel(n_b, tile, n_valid):
    # For even n_b the wrap distance k == n_b/2 is visited from both end
    # blocks; keep only the bi < bj copy of that tile.
    dup_k = n_b // 2 if (n_b % 2 == 0) else -1

    def kernel(gmin_ref, gmax_ref, s_i_ref, s_j_ref, g_i_ref, g_j_ref,
               out_ref, s_col_ref, g_col_ref):
        # gmin/gmax: (n_b,) i32 SMEM  per-block min/max group id (prefetched)
        # s_i/g_i:   (1,1,tile)       block bi (lane-dense)
        # s_j/g_j:   (1,1,tile)       block bj = (bi + k) % n_b (lane-dense)
        # out_ref:   (1,1,tile) f32   per-bi partial sums, resident over k
        # s_col/g_col scratch: (tile,1) block bi re-oriented along sublanes
        bi = pl.program_id(0)
        k = pl.program_id(1)
        bj = (bi + k) % n_b

        @pl.when(k == 0)
        def _init():
            out_ref[...] = jnp.zeros_like(out_ref)
            # Rotate the lane-dense bi-block into sublane orientation once per
            # bi: aligned (tile, tile) square transpose on the XLU, cached in
            # scratch and reused across the whole inner k axis.
            s_sq = jnp.transpose(jnp.broadcast_to(s_i_ref[0], (tile, tile)))
            g_sq = jnp.transpose(jnp.broadcast_to(g_i_ref[0], (tile, tile)))
            s_col_ref[...] = s_sq[:, 0:1]
            g_col_ref[...] = g_sq[:, 0:1]

        # Cheap SMEM-scalar skip: if the two blocks' group-id ranges are
        # disjoint, this tile cannot contain a same-group pair.
        lo = jnp.minimum(bi, bj)
        hi = jnp.maximum(bi, bj)
        overlap = jnp.logical_and(gmax_ref[lo] >= gmin_ref[hi],
                                  gmax_ref[hi] >= gmin_ref[lo])
        cond = overlap
        if dup_k >= 0:
            cond = jnp.logical_and(cond, jnp.logical_or(k != dup_k, bi < bj))

        @pl.when(cond)
        def _compute():
            s_col = s_col_ref[...]            # (tile, 1)  scores of block bi
            g_col = g_col_ref[...]            # (tile, 1)  group ids of block bi
            s_row = s_j_ref[0]                # (1, tile)  scores of block bj
            g_row = g_j_ref[0]                # (1, tile)  group ids of block bj

            # Ordered pair is (i in block min(bi,bj), j in block max(bi,bj));
            # below-diagonal tiles flip the sign of the difference.
            sign = jnp.where(bi <= bj, jnp.float32(1.0), jnp.float32(-1.0))
            diff = (s_col - s_row) * sign                       # (tile, tile)
            # numerically stable -logsigmoid(x) = log1p(exp(-|x|)) - min(x, 0)
            nls = jnp.log1p(jnp.exp(-jnp.abs(diff))) - jnp.minimum(diff, 0.0)

            ii = jax.lax.broadcasted_iota(jnp.int32, (tile, tile), 0)
            jj = jax.lax.broadcasted_iota(jnp.int32, (tile, tile), 1)
            keep = g_col == g_row                               # same group
            keep = jnp.logical_and(keep, ii < n_valid - bi * tile)  # row valid
            keep = jnp.logical_and(keep, jj < n_valid - bj * tile)  # col valid
            # Diagonal tiles additionally require i < j inside the tile.
            keep = jnp.logical_and(keep, jnp.logical_or(bi != bj, ii < jj))

            contrib = jnp.sum(jnp.where(keep, nls, 0.0), axis=0, keepdims=True)
            out_ref[...] += contrib[None, :, :]

    return kernel


def rank_loss(cls_score, sample_idx, *, tile=1024):
    """cls_score: (N,) float, sample_idx: (N,) int.  Returns (1,) f32 loss."""
    n = int(cls_score.shape[0])
    s = cls_score.astype(jnp.float32).reshape(-1)
    g = sample_idx.astype(jnp.int32).reshape(-1)

    # ---- analytic pair count: sum over groups of C(n_g, 2), O(N log N) ----
    gs = jnp.sort(g)
    idx = jnp.arange(n, dtype=jnp.int32)
    new_run = jnp.concatenate(
        [jnp.ones((1,), jnp.bool_), gs[1:] != gs[:-1]])
    run_start = jax.lax.cummax(jnp.where(new_run, idx, 0), axis=0)
    count = jnp.sum(idx - run_start).astype(jnp.float32)

    # ---- tile size: large by default (amortize grid-step overhead), clamped
    # to ~N/16 for small inputs, always a multiple of 128 (lane-dense). ----
    max_useful = 128 * max(1, -(-n // (16 * 128)))
    tile = max(128, min(int(tile), max_useful))
    tile = ((tile + 127) // 128) * 128

    n_b = pl.cdiv(n, tile)
    n_pad = n_b * tile
    pad = n_pad - n
    if pad:
        s_p = jnp.concatenate([s, jnp.zeros((pad,), jnp.float32)])
        # edge-pad ids (keeps the last block's gmin/gmax tight); the in-kernel
        # index-validity mask guarantees padding never forms a pair.
        g_p = jnp.concatenate([g, jnp.broadcast_to(g[n - 1], (pad,))])
    else:
        s_p, g_p = s, g

    s3 = s_p.reshape(n_b, 1, tile)
    g3 = g_p.reshape(n_b, 1, tile)
    g_blocks = g_p.reshape(n_b, tile)
    gmin = jnp.min(g_blocks, axis=1).astype(jnp.int32)
    gmax = jnp.max(g_blocks, axis=1).astype(jnp.int32)

    # Generation-aware VMEM budget (v7x: 64 MiB physical; v5e/v6e: 128 MiB).
    try:
        cap = int(pltpu.get_tpu_info().vmem_capacity_bytes)
    except Exception:
        cap = 64 * 1024 * 1024
    vmem_limit = max(32 * 1024 * 1024,
                     min(cap * 3 // 4, 100 * 1024 * 1024))

    kernel = _make_rank_loss_kernel(n_b, tile, n)
    kk = n_b // 2 + 1

    spec_i = pl.BlockSpec((1, 1, tile), lambda bi, k, gmn, gmx: (bi, 0, 0))
    spec_j = pl.BlockSpec((1, 1, tile),
                          lambda bi, k, gmn, gmx: ((bi + k) % n_b, 0, 0))

    partial = pl.pallas_call(
        kernel,
        out_shape=jax.ShapeDtypeStruct((n_b, 1, tile), jnp.float32),
        grid_spec=pltpu.PrefetchScalarGridSpec(
            num_scalar_prefetch=2,
            grid=(n_b, kk),
            in_specs=[spec_i, spec_j, spec_i, spec_j],
            out_specs=pl.BlockSpec((1, 1, tile),
                                   lambda bi, k, gmn, gmx: (bi, 0, 0)),
            scratch_shapes=[pltpu.VMEM((tile, 1), jnp.float32),
                            pltpu.VMEM((tile, 1), jnp.int32)],
        ),
        compiler_params=pltpu.CompilerParams(
            dimension_semantics=("parallel", "arbitrary"),
            vmem_limit_bytes=vmem_limit,
        ),
    )(gmin, gmax, s3, s3, g3, g3)

    total = jnp.sum(partial)
    return (total / count).reshape(1)  # match torch's FloatTensor([...]) shape


def _reference(cls_score, sample_idx):
    """Pure-JAX reference mirroring the PyTorch double loop."""
    s = jnp.asarray(cls_score, jnp.float32)
    g = jnp.asarray(sample_idx)
    total = 0.0
    count = 0
    for i in range(s.shape[0] - 1):
        for j in range(i + 1, s.shape[0]):
            if int(g[i]) != int(g[j]):
                continue
            d = s[i] - s[j]
            total = total + (-jax.nn.log_sigmoid(d))
            count += 1
    return jnp.asarray([total / count], jnp.float32)


if __name__ == "__main__":
    key = jax.random.PRNGKey(0)
    N = 8
    cls_score = jax.random.normal(key, (N,), dtype=jnp.float32)
    # group ids: samples in the same group form ranking pairs
    sample_idx = jnp.array([0, 0, 0, 1, 1, 1, 2, 2], dtype=jnp.int32)

    loss = rank_loss(cls_score, sample_idx)
    jax.block_until_ready(loss)

    ref = _reference(cls_score, sample_idx)
    assert jnp.allclose(loss, ref, rtol=1e-5, atol=1e-5), (loss, ref)

    print("KERNEL_OK")
</pallas_src>

<mosaic_0001>
module attributes {stable_mosaic.version = 11 : i64} {
  func.func @kernel(%arg0: i32, %arg1: i32, %arg2: memref<1xi32, #tpu.memory_space<smem>>, %arg3: memref<1xi32, #tpu.memory_space<smem>>, %arg4: memref<1x1x128xf32, #tpu.memory_space<vmem>>, %arg5: memref<1x1x128xf32, #tpu.memory_space<vmem>>, %arg6: memref<1x1x128xi32, #tpu.memory_space<vmem>>, %arg7: memref<1x1x128xi32, #tpu.memory_space<vmem>>, %arg8: memref<1x1x128xf32, #tpu.memory_space<vmem>>, %arg9: memref<128x1xf32, #tpu.memory_space<vmem>>, %arg10: memref<128x1xi32, #tpu.memory_space<vmem>>) attributes {dimension_semantics = [#tpu.dimension_semantics<parallel>, #tpu.dimension_semantics<arbitrary>], iteration_bounds = array<i64: 1, 1>, scalar_prefetch = 2 : i64, scratch_operands = 2 : i64, tpu.core_type = #tpu.core_type<tc>, window_params = [{transform_indices = @transform_0, window_bounds = array<i64: 1, 1, 128>}, {transform_indices = @transform_1, window_bounds = array<i64: 1, 1, 128>}, {transform_indices = @transform_2, window_bounds = array<i64: 1, 1, 128>}, {transform_indices = @transform_3, window_bounds = array<i64: 1, 1, 128>}, {transform_indices = @transform_4, window_bounds = array<i64: 1, 1, 128>}]} {
    %0 = arith.addi %arg0, %arg1 : i32
    %c1_i32 = arith.constant 1 : i32
    %c0_i32 = arith.constant 0 : i32
    %1 = arith.cmpi eq, %c1_i32, %c0_i32 : i32
    %c1_i32_0 = arith.constant 1 : i32
    %2 = arith.select %1, %c1_i32_0, %c1_i32 : i32
    %3 = arith.remsi %0, %2 : i32
    %c0_i32_1 = arith.constant 0 : i32
    %4 = arith.cmpi ne, %3, %c0_i32_1 : i32
    %c0_i32_2 = arith.constant 0 : i32
    %5 = arith.cmpi slt, %3, %c0_i32_2 : i32
    %c0_i32_3 = arith.constant 0 : i32
    %6 = arith.cmpi slt, %2, %c0_i32_3 : i32
    %7 = arith.xori %5, %6 : i1
    %8 = arith.andi %7, %4 : i1
    %9 = arith.addi %3, %2 : i32
    %10 = arith.select %8, %9, %3 : i32
    %c0_i32_4 = arith.constant 0 : i32
    %11 = arith.cmpi eq, %arg1, %c0_i32_4 : i32
    %12 = arith.extui %11 : i1 to i32
    %c0_i32_5 = arith.constant 0 : i32
    %13 = arith.cmpi ne, %12, %c0_i32_5 : i32
    scf.if %13 {
      %cst = arith.constant 0.000000e+00 : f32
      %29 = vector.broadcast %cst : f32 to vector<1x1x128xf32>
      %c0 = arith.constant 0 : index
      %c0_7 = arith.constant 0 : index
      %c0_8 = arith.constant 0 : index
      %30 = vector.load %arg8[%c0, %c0_7, %c0_8] : memref<1x1x128xf32, #tpu.memory_space<vmem>>, vector<1x1x128xf32>
      tpu.vector_store %arg8[%c0, %c0_7, %c0_8], %29 {strides = array<i32>} : memref<1x1x128xf32, #tpu.memory_space<vmem>>, vector<1x1x128xf32>,
      %c0_9 = arith.constant 0 : index
      %c0_10 = arith.constant 0 : index
      %c0_11 = arith.constant 0 : index
      %31 = vector.load %arg4[%c0_9, %c0_10, %c0_11] : memref<1x1x128xf32, #tpu.memory_space<vmem>>, vector<1x1x128xf32>
      %32 = vector.shape_cast %31 : vector<1x1x128xf32> to vector<1x128xf32>
      %33 = vector.shape_cast %32 : vector<1x128xf32> to vector<1x128xf32>
      %34 = vector.broadcast %33 : vector<1x128xf32> to vector<128x128xf32>
      %35 = tpu.transpose %34, [1, 0] : vector<128x128xf32> -> vector<128x128xf32>
      %c0_12 = arith.constant 0 : index
      %c0_13 = arith.constant 0 : index
      %c0_14 = arith.constant 0 : index
      %36 = vector.load %arg6[%c0_12, %c0_13, %c0_14] : memref<1x1x128xi32, #tpu.memory_space<vmem>>, vector<1x1x128xi32>
      %37 = vector.shape_cast %36 : vector<1x1x128xi32> to vector<1x128xi32>
      %38 = vector.shape_cast %37 : vector<1x128xi32> to vector<1x128xi32>
      %39 = vector.broadcast %38 : vector<1x128xi32> to vector<128x128xi32>
      %40 = tpu.transpose %39, [1, 0] : vector<128x128xi32> -> vector<128x128xi32>
      %41 = vector.extract_strided_slice %35 {offsets = [0, 0], sizes = [128, 1], strides = [1, 1]} : vector<128x128xf32> to vector<128x1xf32>
      %c0_15 = arith.constant 0 : index
      %c0_16 = arith.constant 0 : index
      %42 = vector.load %arg9[%c0_15, %c0_16] : memref<128x1xf32, #tpu.memory_space<vmem>>, vector<128x1xf32>
      tpu.vector_store %arg9[%c0_15, %c0_16], %41 {strides = array<i32>} : memref<128x1xf32, #tpu.memory_space<vmem>>, vector<128x1xf32>,
      %43 = vector.extract_strided_slice %40 {offsets = [0, 0], sizes = [128, 1], strides = [1, 1]} : vector<128x128xi32> to vector<128x1xi32>
      %c0_17 = arith.constant 0 : index
      %c0_18 = arith.constant 0 : index
      %44 = vector.load %arg10[%c0_17, %c0_18] : memref<128x1xi32, #tpu.memory_space<vmem>>, vector<128x1xi32>
      tpu.vector_store %arg10[%c0_17, %c0_18], %43 {strides = array<i32>} : memref<128x1xi32, #tpu.memory_space<vmem>>, vector<128x1xi32>,
    } else {
    }
    %14 = arith.minsi %arg0, %10 : i32
    %15 = arith.maxsi %arg0, %10 : i32
    %16 = arith.index_cast %14 : i32 to index
    %17 = memref.load %arg3[%16] : memref<1xi32, #tpu.memory_space<smem>>
    %18 = arith.index_cast %15 : i32 to index
    %19 = memref.load %arg2[%18] : memref<1xi32, #tpu.memory_space<smem>>
    %20 = arith.cmpi sge, %17, %19 : i32
    %21 = arith.index_cast %15 : i32 to index
    %22 = memref.load %arg3[%21] : memref<1xi32, #tpu.memory_space<smem>>
    %23 = arith.index_cast %14 : i32 to index
    %24 = memref.load %arg2[%23] : memref<1xi32, #tpu.memory_space<smem>>
    %25 = arith.cmpi sge, %22, %24 : i32
    %26 = arith.andi %20, %25 : i1
    %27 = arith.extui %26 : i1 to i32
    %c0_i32_6 = arith.constant 0 : i32
    %28 = arith.cmpi ne, %27, %c0_i32_6 : i32
    scf.if %28 {
      %c0 = arith.constant 0 : index
      %c0_7 = arith.constant 0 : index
      %29 = vector.load %arg9[%c0, %c0_7] : memref<128x1xf32, #tpu.memory_space<vmem>>, vector<128x1xf32>
      %c0_8 = arith.constant 0 : index
      %c0_9 = arith.constant 0 : index
      %30 = vector.load %arg10[%c0_8, %c0_9] : memref<128x1xi32, #tpu.memory_space<vmem>>, vector<128x1xi32>
      %c0_10 = arith.constant 0 : index
      %c0_11 = arith.constant 0 : index
      %c0_12 = arith.constant 0 : index
      %31 = vector.load %arg5[%c0_10, %c0_11, %c0_12] : memref<1x1x128xf32, #tpu.memory_space<vmem>>, vector<1x1x128xf32>
      %32 = vector.shape_cast %31 : vector<1x1x128xf32> to vector<1x128xf32>
      %c0_13 = arith.constant 0 : index
      %c0_14 = arith.constant 0 : index
      %c0_15 = arith.constant 0 : index
      %33 = vector.load %arg7[%c0_13, %c0_14, %c0_15] : memref<1x1x128xi32, #tpu.memory_space<vmem>>, vector<1x1x128xi32>
      %34 = vector.shape_cast %33 : vector<1x1x128xi32> to vector<1x128xi32>
      %35 = arith.cmpi sle, %arg0, %10 : i32
      %cst = arith.constant 1.000000e+00 : f32
      %cst_16 = arith.constant -1.000000e+00 : f32
      %36 = arith.select %35, %cst, %cst_16 : f32
      %37 = vector.broadcast %29 : vector<128x1xf32> to vector<128x128xf32>
      %38 = vector.broadcast %32 : vector<1x128xf32> to vector<128x128xf32>
      %39 = arith.subf %37, %38 : vector<128x128xf32>
      %40 = vector.broadcast %36 : f32 to vector<128x128xf32>
      %41 = arith.mulf %39, %40 : vector<128x128xf32>
      %42 = math.absf %41 : vector<128x128xf32>
      %cst_17 = arith.constant 0.000000e+00 : f32
      %43 = vector.broadcast %cst_17 : f32 to vector<128x128xf32>
      %44 = arith.subf %43, %42 : vector<128x128xf32>
      %45 = math.exp %44 : vector<128x128xf32>
      %46 = math.log1p %45 : vector<128x128xf32>
      %cst_18 = arith.constant 0.000000e+00 : f32
      %47 = vector.broadcast %cst_18 : f32 to vector<128x128xf32>
      %48 = arith.minimumf %41, %47 : vector<128x128xf32>
      %49 = arith.subf %46, %48 : vector<128x128xf32>
      %50 = tpu.iota {dimensions = array<i32: 0>} : vector<128x128xi32>
      %51 = tpu.iota {dimensions = array<i32: 1>} : vector<128x128xi32>
      %52 = vector.broadcast %30 : vector<128x1xi32> to vector<128x128xi32>
      %53 = vector.broadcast %34 : vector<1x128xi32> to vector<128x128xi32>
      %54 = arith.cmpi eq, %52, %53 : vector<128x128xi32>
      %c128_i32 = arith.constant 128 : i32
      %55 = arith.muli %arg0, %c128_i32 : i32
      %c8_i32 = arith.constant 8 : i32
      %56 = arith.subi %c8_i32, %55 : i32
      %57 = vector.broadcast %56 : i32 to vector<128x128xi32>
      %58 = arith.cmpi slt, %50, %57 : vector<128x128xi32>
      %59 = arith.andi %54, %58 : vector<128x128xi1>
      %c128_i32_19 = arith.constant 128 : i32
      %60 = arith.muli %10, %c128_i32_19 : i32
      %c8_i32_20 = arith.constant 8 : i32
      %61 = arith.subi %c8_i32_20, %60 : i32
      %62 = vector.broadcast %61 : i32 to vector<128x128xi32>
      %63 = arith.cmpi slt, %51, %62 : vector<128x128xi32>
      %64 = arith.andi %59, %63 : vector<128x128xi1>
      %65 = arith.cmpi ne, %arg0, %10 : i32
      %66 = arith.cmpi slt, %50, %51 : vector<128x128xi32>
      %67 = vector.broadcast %65 : i1 to vector<128x128xi1>
      %68 = arith.ori %67, %66 : vector<128x128xi1>
      %69 = arith.andi %64, %68 : vector<128x128xi1>
      %cst_21 = arith.constant 0.000000e+00 : f32
      %70 = vector.broadcast %cst_21 : f32 to vector<128x128xf32>
      %71 = arith.select %69, %49, %70 : vector<128x128xi1>, vector<128x128xf32>
      %cst_22 = arith.constant dense<0.000000e+00> : vector<128xf32>
      %72 = vector.multi_reduction <add>, %71, %cst_22 [0] : vector<128x128xf32> to vector<128xf32>
      %73 = vector.shape_cast %72 : vector<128xf32> to vector<1x128xf32>
      %c0_23 = arith.constant 0 : index
      %c0_24 = arith.constant 0 : index
      %c0_25 = arith.constant 0 : index
      %74 = vector.load %arg8[%c0_23, %c0_24, %c0_25] : memref<1x1x128xf32, #tpu.memory_space<vmem>>, vector<1x1x128xf32>
      %75 = vector.shape_cast %73 : vector<1x128xf32> to vector<1x1x128xf32>
      %76 = arith.addf %74, %75 : vector<1x1x128xf32>
      %c0_26 = arith.constant 0 : index
      %c0_27 = arith.constant 0 : index
      %c0_28 = arith.constant 0 : index
      %77 = vector.load %arg8[%c0_26, %c0_27, %c0_28] : memref<1x1x128xf32, #tpu.memory_space<vmem>>, vector<1x1x128xf32>
      tpu.vector_store %arg8[%c0_26, %c0_27, %c0_28], %76 {strides = array<i32>} : memref<1x1x128xf32, #tpu.memory_space<vmem>>, vector<1x1x128xf32>,
    } else {
    }
    return
  }
  func.func @transform_0(%arg0: i32, %arg1: i32, %arg2: memref<1xi32, #tpu.memory_space<smem>>, %arg3: memref<1xi32, #tpu.memory_space<smem>>) -> (i32, i32, i32) {
    %c0_i32 = arith.constant 0 : i32
    %c0_i32_0 = arith.constant 0 : i32
    %c0_i32_1 = arith.constant 0 : i32
    return %arg0, %c0_i32, %c0_i32_0 : i32, i32, i32
  }
  func.func @transform_1(%arg0: i32, %arg1: i32, %arg2: memref<1xi32, #tpu.memory_space<smem>>, %arg3: memref<1xi32, #tpu.memory_space<smem>>) -> (i32, i32, i32) {
    %0 = arith.addi %arg0, %arg1 : i32
    %c1_i32 = arith.constant 1 : i32
    %c0_i32 = arith.constant 0 : i32
    %1 = arith.cmpi eq, %c1_i32, %c0_i32 : i32
    %c1_i32_0 = arith.constant 1 : i32
    %2 = arith.select %1, %c1_i32_0, %c1_i32 : i32
    %3 = arith.remsi %0, %2 : i32
    %c0_i32_1 = arith.constant 0 : i32
    %4 = arith.cmpi ne, %3, %c0_i32_1 : i32
    %c0_i32_2 = arith.constant 0 : i32
    %5 = arith.cmpi slt, %3, %c0_i32_2 : i32
    %c0_i32_3 = arith.constant 0 : i32
    %6 = arith.cmpi slt, %2, %c0_i32_3 : i32
    %7 = arith.xori %5, %6 : i1
    %8 = arith.andi %7, %4 : i1
    %9 = arith.addi %3, %2 : i32
    %10 = arith.select %8, %9, %3 : i32
    %c0_i32_4 = arith.constant 0 : i32
    %c0_i32_5 = arith.constant 0 : i32
    %c0_i32_6 = arith.constant 0 : i32
    return %10, %c0_i32_4, %c0_i32_5 : i32, i32, i32
  }
  func.func @transform_2(%arg0: i32, %arg1: i32, %arg2: memref<1xi32, #tpu.memory_space<smem>>, %arg3: memref<1xi32, #tpu.memory_space<smem>>) -> (i32, i32, i32) {
    %c0_i32 = arith.constant 0 : i32
    %c0_i32_0 = arith.constant 0 : i32
    %c0_i32_1 = arith.constant 0 : i32
    return %arg0, %c0_i32, %c0_i32_0 : i32, i32, i32
  }
  func.func @transform_3(%arg0: i32, %arg1: i32, %arg2: memref<1xi32, #tpu.memory_space<smem>>, %arg3: memref<1xi32, #tpu.memory_space<smem>>) -> (i32, i32, i32) {
    %0 = arith.addi %arg0, %arg1 : i32
    %c1_i32 = arith.constant 1 : i32
    %c0_i32 = arith.constant 0 : i32
    %1 = arith.cmpi eq, %c1_i32, %c0_i32 : i32
    %c1_i32_0 = arith.constant 1 : i32
    %2 = arith.select %1, %c1_i32_0, %c1_i32 : i32
    %3 = arith.remsi %0, %2 : i32
    %c0_i32_1 = arith.constant 0 : i32
    %4 = arith.cmpi ne, %3, %c0_i32_1 : i32
    %c0_i32_2 = arith.constant 0 : i32
    %5 = arith.cmpi slt, %3, %c0_i32_2 : i32
    %c0_i32_3 = arith.constant 0 : i32
    %6 = arith.cmpi slt, %2, %c0_i32_3 : i32
    %7 = arith.xori %5, %6 : i1
    %8 = arith.andi %7, %4 : i1
    %9 = arith.addi %3, %2 : i32
    %10 = arith.select %8, %9, %3 : i32
    %c0_i32_4 = arith.constant 0 : i32
    %c0_i32_5 = arith.constant 0 : i32
    %c0_i32_6 = arith.constant 0 : i32
    return %10, %c0_i32_4, %c0_i32_5 : i32, i32, i32
  }
  func.func @transform_4(%arg0: i32, %arg1: i32, %arg2: memref<1xi32, #tpu.memory_space<smem>>, %arg3: memref<1xi32, #tpu.memory_space<smem>>) -> (i32, i32, i32) {
    %c0_i32 = arith.constant 0 : i32
    %c0_i32_0 = arith.constant 0 : i32
    %c0_i32_1 = arith.constant 0 : i32
    return %arg0, %c0_i32, %c0_i32_0 : i32, i32, i32
  }
}

</mosaic_0001>

<llo_original>
// kernel: tpu_custom_call.1
$region0: #{tpu_custom_call.1}
  #allocation0 [shape = 'u32[]', space=smem, size = 0x4, offset = 0x4, fixed_abs, tag = 'smem constant byte address 0x4 - core index']
  #allocation1 [shape = 'u32[144,128]{1,0:T(1,128)}', space=vmem, size = 0x12000, scoped, tag = 'internal scratch']
  #allocation2 [shape = 'f32[128,1]{1,0:T(8,128)}', space=vmem, size = 0x10000, scoped, tag = 'scratch operand']
  #allocation3 [shape = 's32[128,1]{1,0:T(8,128)}', space=vmem, size = 0x10000, scoped, tag = 'scratch operand']
  #allocation4 [shape = 's32[1]{0}', space=sflag, size = 0x4, scoped, tag = 'scoped memory for tpu_custom_call.1']
  #allocation5 [shape = 's32[1]{0:T(128)S(6)}', space=smem, size = 0x200, scoped, tag = 'prefetched SMEM operand 0']
  #allocation6 [shape = 's32[1]{0:T(128)S(6)}', space=smem, size = 0x200, scoped, tag = 'prefetched SMEM operand 1']
  %s0 = inlined_call_operand.<no memory space> [shape: s32[1], index: 0, kind: input, shape index: {}]
  %s1 = inlined_call_operand.<no memory space> [shape: s32[1], index: 1, kind: input, shape index: {}]
  %s2 = inlined_call_operand.vmem [shape: f32[1,1,128], index: 2, kind: input, shape index: {}]
  %s3 = inlined_call_operand.vmem [shape: f32[1,1,128], index: 3, kind: input, shape index: {}]
  %s4 = inlined_call_operand.vmem [shape: s32[1,1,128], index: 4, kind: input, shape index: {}]
  %s5 = inlined_call_operand.vmem [shape: s32[1,1,128], index: 5, kind: input, shape index: {}]
  %s6 = inlined_call_operand.hbm [shape: f32[1,1,128], index: 6, kind: output, shape index: {}]
  %s7 = sld [smem:[#allocation0]]
  $region34: #{tpu_custom_call.1} parent=0
    _
  %s9 = ssub.s32 1, %s7
  %s10 = scalar_select 0, %s9, %s7
  %11 = sst [smem:[#allocation5]] %s0
  %12 = sst [smem:[#allocation6]] %s1
  $region1: #{tpu_custom_call.1} parent=0
    #allocation7 [shape = 'u8[512]{0}', space=vmem, size = 0x400, scoped, tag = 'output window, operand 0, single buffered']
    #allocation8 [shape = 's32[1]{0}', space=sflag, size = 0x4, scoped, tag = 'scoped memory for tpu_custom_call.1']
    %13 = vsyncpa [#allocation8], 0
    // Predicated region
    $region2: #{tpu_custom_call.1} parent=1 // pred_check
      _
    $region3: #{tpu_custom_call.1} parent=1 // pred_check_branch
      %15 = sbr.rel (0) target = $region5
    $region4: #{tpu_custom_call.1} parent=1 // pred_region
      _
    $region5: #{tpu_custom_call.1} parent=1 // pred_fallthru
      _
    // Predicated region
    $region6: #{tpu_custom_call.1} parent=1 // pred_check
      _
    $region7: #{tpu_custom_call.1} parent=1 // pred_check_branch
      %17 = sbr.rel (0) target = $region9
    $region8: #{tpu_custom_call.1} parent=1 // pred_region
      _
    $region9: #{tpu_custom_call.1} parent=1 // pred_fallthru
      _
    // Predicated region
    $region10: #{tpu_custom_call.1} parent=1 // pred_check
      _
    $region11: #{tpu_custom_call.1} parent=1 // pred_check_branch
      %19 = sbr.rel (0) target = $region13
    $region12: #{tpu_custom_call.1} parent=1 // pred_region
      _
    $region13: #{tpu_custom_call.1} parent=1 // pred_fallthru
      _
    // Predicated region
    $region14: #{tpu_custom_call.1} parent=1 // pred_check
      _
    $region15: #{tpu_custom_call.1} parent=1 // pred_check_branch
      %21 = sbr.rel (0) target = $region17
    $region16: #{tpu_custom_call.1} parent=1 // pred_region
      _
    $region17: #{tpu_custom_call.1} parent=1 // pred_fallthru
      _
    %p22 = scmp.eq.s32.totalorder 0, 0
    // Predicated region
    $region18: #{tpu_custom_call.1} parent=1 // pred_check
      %p23 = pneg %p22
    $region19: #{tpu_custom_call.1} parent=1 // pred_check_branch
      %25 = sbr.rel (%p23) target = $region21
    $region20: #{tpu_custom_call.1} parent=1 // pred_region
      %26 = vst [vmem:[#allocation7] sm:$0x1] 0.0
      %v27 = vld [vmem:[%s2] sm:$0x1]
      %v29 = vlaneseq
      %v30 = vshrl.u32 %v29, 7
      %v31 = vsub.s32 0, %v30
      %v32 = vrot.slane %v27, %v31
      %34 = vxpose.xlu0.b32.start [1/16] %v32, 128
      %35 = vxpose.xlu0.b32.cont [2/16] %v32, 128
      %36 = vxpose.xlu0.b32.cont [3/16] %v32, 128
      %37 = vxpose.xlu0.b32.cont [4/16] %v32, 128
      %38 = vxpose.xlu0.b32.cont [5/16] %v32, 128
      %39 = vxpose.xlu0.b32.cont [6/16] %v32, 128
      %40 = vxpose.xlu0.b32.cont [7/16] %v32, 128
      %41 = vxpose.xlu0.b32.cont [8/16] %v32, 128
      %42 = vxpose.xlu0.b32.cont [9/16] %v32, 128
      %43 = vxpose.xlu0.b32.cont [10/16] %v32, 128
      %44 = vxpose.xlu0.b32.cont [11/16] %v32, 128
      %45 = vxpose.xlu0.b32.cont [12/16] %v32, 128
      %46 = vxpose.xlu0.b32.cont [13/16] %v32, 128
      %47 = vxpose.xlu0.b32.cont [14/16] %v32, 128
      %48 = vxpose.xlu0.b32.cont [15/16] %v32, 128
      %49 = vxpose.xlu0.b32.end [16/16] %v32, 128
      %v50 = vpop.trf.xlu0
      %v51 = vpop.trf.xlu0
      %v52 = vpop.trf.xlu0
      %v53 = vpop.trf.xlu0
      %v54 = vpop.trf.xlu0
      %v55 = vpop.trf.xlu0
      %v56 = vpop.trf.xlu0
      %v57 = vpop.trf.xlu0
      %v58 = vpop.trf.xlu0
      %v59 = vpop.trf.xlu0
      %v60 = vpop.trf.xlu0
      %v61 = vpop.trf.xlu0
      %v62 = vpop.trf.xlu0
      %v63 = vpop.trf.xlu0
      %v64 = vpop.trf.xlu0
      %v65 = vpop.trf.xlu0
      %v66 = vld [vmem:[%s4] sm:$0x1]
      %v67 = vlaneseq
      %v68 = vshrl.u32 %v67, 7
      %v69 = vsub.s32 0, %v68
      %v70 = vrot.slane %v66, %v69
      %71 = vxpose.xlu0.b32.start [1/16] %v70, 128
      %72 = vxpose.xlu0.b32.cont [2/16] %v70, 128
      %73 = vxpose.xlu0.b32.cont [3/16] %v70, 128
      %74 = vxpose.xlu0.b32.cont [4/16] %v70, 128
      %75 = vxpose.xlu0.b32.cont [5/16] %v70, 128
      %76 = vxpose.xlu0.b32.cont [6/16] %v70, 128
      %77 = vxpose.xlu0.b32.cont [7/16] %v70, 128
      %78 = vxpose.xlu0.b32.cont [8/16] %v70, 128
      %79 = vxpose.xlu0.b32.cont [9/16] %v70, 128
      %80 = vxpose.xlu0.b32.cont [10/16] %v70, 128
      %81 = vxpose.xlu0.b32.cont [11/16] %v70, 128
      %82 = vxpose.xlu0.b32.cont [12/16] %v70, 128
      %83 = vxpose.xlu0.b32.cont [13/16] %v70, 128
      %84 = vxpose.xlu0.b32.cont [14/16] %v70, 128
      %85 = vxpose.xlu0.b32.cont [15/16] %v70, 128
      %86 = vxpose.xlu0.b32.end [16/16] %v70, 128
      %v87 = vpop.trf.xlu0
      %v88 = vpop.trf.xlu0
      %v89 = vpop.trf.xlu0
      %v90 = vpop.trf.xlu0
      %v91 = vpop.trf.xlu0
      %v92 = vpop.trf.xlu0
      %v93 = vpop.trf.xlu0
      %v94 = vpop.trf.xlu0
      %v95 = vpop.trf.xlu0
      %v96 = vpop.trf.xlu0
      %v97 = vpop.trf.xlu0
      %v98 = vpop.trf.xlu0
      %v99 = vpop.trf.xlu0
      %v100 = vpop.trf.xlu0
      %v101 = vpop.trf.xlu0
      %v102 = vpop.trf.xlu0
      %vm103 = vcmask 7168
      %104 = vst.msk [vmem:[#allocation2] sm:$0xff] %vm103, %v50
      %105 = vst.msk [vmem:[#allocation2 + $0x8] sm:$0xff] %vm103, %v51
      %106 = vst.msk [vmem:[#allocation2 + $0x10] sm:$0xff] %vm103, %v52
      %107 = vst.msk [vmem:[#allocation2 + $0x18] sm:$0xff] %vm103, %v53
      %108 = vst.msk [vmem:[#allocation2 + $0x20] sm:$0xff] %vm103, %v54
      %109 = vst.msk [vmem:[#allocation2 + $0x28] sm:$0xff] %vm103, %v55
      %110 = vst.msk [vmem:[#allocation2 + $0x30] sm:$0xff] %vm103, %v56
      %111 = vst.msk [vmem:[#allocation2 + $0x38] sm:$0xff] %vm103, %v57
      %112 = vst.msk [vmem:[#allocation2 + $0x40] sm:$0xff] %vm103, %v58
      %113 = vst.msk [vmem:[#allocation2 + $0x48] sm:$0xff] %vm103, %v59
      %114 = vst.msk [vmem:[#allocation2 + $0x50] sm:$0xff] %vm103, %v60
      %115 = vst.msk [vmem:[#allocation2 + $0x58] sm:$0xff] %vm103, %v61
      %116 = vst.msk [vmem:[#allocation2 + $0x60] sm:$0xff] %vm103, %v62
      %117 = vst.msk [vmem:[#allocation2 + $0x68] sm:$0xff] %vm103, %v63
      %118 = vst.msk [vmem:[#allocation2 + $0x70] sm:$0xff] %vm103, %v64
      %119 = vst.msk [vmem:[#allocation2 + $0x78] sm:$0xff] %vm103, %v65
      %120 = vst.msk [vmem:[#allocation3] sm:$0xff] %vm103, %v87
      %121 = vst.msk [vmem:[#allocation3 + $0x8] sm:$0xff] %vm103, %v88
      %122 = vst.msk [vmem:[#allocation3 + $0x10] sm:$0xff] %vm103, %v89
      %123 = vst.msk [vmem:[#allocation3 + $0x18] sm:$0xff] %vm103, %v90
      %124 = vst.msk [vmem:[#allocation3 + $0x20] sm:$0xff] %vm103, %v91
      %125 = vst.msk [vmem:[#allocation3 + $0x28] sm:$0xff] %vm103, %v92
      %126 = vst.msk [vmem:[#allocation3 + $0x30] sm:$0xff] %vm103, %v93
      %127 = vst.msk [vmem:[#allocation3 + $0x38] sm:$0xff] %vm103, %v94
      %128 = vst.msk [vmem:[#allocation3 + $0x40] sm:$0xff] %vm103, %v95
      %129 = vst.msk [vmem:[#allocation3 + $0x48] sm:$0xff] %vm103, %v96
      %130 = vst.msk [vmem:[#allocation3 + $0x50] sm:$0xff] %vm103, %v97
      %131 = vst.msk [vmem:[#allocation3 + $0x58] sm:$0xff] %vm103, %v98
      %132 = vst.msk [vmem:[#allocation3 + $0x60] sm:$0xff] %vm103, %v99
      %133 = vst.msk [vmem:[#allocation3 + $0x68] sm:$0xff] %vm103, %v100
      %134 = vst.msk [vmem:[#allocation3 + $0x70] sm:$0xff] %vm103, %v101
      %135 = vst.msk [vmem:[#allocation3 + $0x78] sm:$0xff] %vm103, %v102
    $region21: #{tpu_custom_call.1} parent=1 // pred_fallthru
      _
    %s136 = sld [smem:[#allocation6]]
    %s137 = sld [smem:[#allocation5]]
    %p138 = scmp.ge.s32.totalorder %s136, %s137
    %s139 = sld [smem:[#allocation6]]
    %s140 = sld [smem:[#allocation5]]
    %p141 = scmp.ge.s32.totalorder %s139, %s140
    %p142 = pnand %p138, %p141
    %p143 = pneg %p142
    // Predicated region
    $region22: #{tpu_custom_call.1} parent=1 // pred_check
      _
    $region23: #{tpu_custom_call.1} parent=1 // pred_check_branch
      %145 = sbr.rel (%p142) target = $region25
    $region24: #{tpu_custom_call.1} parent=1 // pred_region
      %v146 = vld [vmem:[#allocation2] sm:$0xff]
      %v147 = vld [vmem:[#allocation2 + $0x8] sm:$0xff]
      %v148 = vld [vmem:[#allocation2 + $0x10] sm:$0xff]
      %v149 = vld [vmem:[#allocation2 + $0x18] sm:$0xff]
      %v150 = vld [vmem:[#allocation2 + $0x20] sm:$0xff]
      %v151 = vld [vmem:[#allocation2 + $0x28] sm:$0xff]
      %v152 = vld [vmem:[#allocation2 + $0x30] sm:$0xff]
      %v153 = vld [vmem:[#allocation2 + $0x38] sm:$0xff]
      %v154 = vld [vmem:[#allocation2 + $0x40] sm:$0xff]
      %v155 = vld [vmem:[#allocation2 + $0x48] sm:$0xff]
      %v156 = vld [vmem:[#allocation2 + $0x50] sm:$0xff]
      %v157 = vld [vmem:[#allocation2 + $0x58] sm:$0xff]
      %v158 = vld [vmem:[#allocation2 + $0x60] sm:$0xff]
      %v159 = vld [vmem:[#allocation2 + $0x68] sm:$0xff]
      %v160 = vld [vmem:[#allocation2 + $0x70] sm:$0xff]
      %v161 = vld [vmem:[#allocation2 + $0x78] sm:$0xff]
      %v162 = vld [vmem:[#allocation3] sm:$0xff]
      %v163 = vld [vmem:[#allocation3 + $0x8] sm:$0xff]
      %v164 = vld [vmem:[#allocation3 + $0x10] sm:$0xff]
      %v165 = vld [vmem:[#allocation3 + $0x18] sm:$0xff]
      %v166 = vld [vmem:[#allocation3 + $0x20] sm:$0xff]
      %v167 = vld [vmem:[#allocation3 + $0x28] sm:$0xff]
      %v168 = vld [vmem:[#allocation3 + $0x30] sm:$0xff]
      %v169 = vld [vmem:[#allocation3 + $0x38] sm:$0xff]
      %v170 = vld [vmem:[#allocation3 + $0x40] sm:$0xff]
      %v171 = vld [vmem:[#allocation3 + $0x48] sm:$0xff]
      %v172 = vld [vmem:[#allocation3 + $0x50] sm:$0xff]
      %v173 = vld [vmem:[#allocation3 + $0x58] sm:$0xff]
      %v174 = vld [vmem:[#allocation3 + $0x60] sm:$0xff]
      %v175 = vld [vmem:[#allocation3 + $0x68] sm:$0xff]
      %v176 = vld [vmem:[#allocation3 + $0x70] sm:$0xff]
      %v177 = vld [vmem:[#allocation3 + $0x78] sm:$0xff]
      %v178 = vld [vmem:[%s3] sm:$0x1]
      %v179 = vld [vmem:[%s5] sm:$0x1]
      %p180 = scmp.le.s32.totalorder 0, 0
      %s181 = scalar_select %p180, 1.0, -1.0
      %183 = vset.pattern.permute.xlu0 0
      %184 = vperm.xlu0 %183, %v146
      %v185 = vpop.permute.xlu0 %184
      %188 = vset.pattern.permute.xlu0 0
      %189 = vperm.xlu0 %188, %v147
      %v190 = vpop.permute.xlu0 %189
      %193 = vset.pattern.permute.xlu0 0
      %194 = vperm.xlu0 %193, %v148
      %v195 = vpop.permute.xlu0 %194
      %198 = vset.pattern.permute.xlu0 0
      %199 = vperm.xlu0 %198, %v149
      %v200 = vpop.permute.xlu0 %199
      %203 = vset.pattern.permute.xlu0 0
      %204 = vperm.xlu0 %203, %v150
      %v205 = vpop.permute.xlu0 %204
      %208 = vset.pattern.permute.xlu0 0
      %209 = vperm.xlu0 %208, %v151
      %v210 = vpop.permute.xlu0 %209
      %213 = vset.pattern.permute.xlu0 0
      %214 = vperm.xlu0 %213, %v152
      %v215 = vpop.permute.xlu0 %214
      %218 = vset.pattern.permute.xlu0 0
      %219 = vperm.xlu0 %218, %v153
      %v220 = vpop.permute.xlu0 %219
      %223 = vset.pattern.permute.xlu0 0
      %224 = vperm.xlu0 %223, %v154
      %v225 = vpop.permute.xlu0 %224
      %228 = vset.pattern.permute.xlu0 0
      %229 = vperm.xlu0 %228, %v155
      %v230 = vpop.permute.xlu0 %229
      %233 = vset.pattern.permute.xlu0 0
      %234 = vperm.xlu0 %233, %v156
      %v235 = vpop.permute.xlu0 %234
      %238 = vset.pattern.permute.xlu0 0
      %239 = vperm.xlu0 %238, %v157
      %v240 = vpop.permute.xlu0 %239
      %243 = vset.pattern.permute.xlu0 0
      %244 = vperm.xlu0 %243, %v158
      %v245 = vpop.permute.xlu0 %244
      %248 = vset.pattern.permute.xlu0 0
      %249 = vperm.xlu0 %248, %v159
      %v250 = vpop.permute.xlu0 %249
      %253 = vset.pattern.permute.xlu0 0
      %254 = vperm.xlu0 %253, %v160
      %v255 = vpop.permute.xlu0 %254
      %258 = vset.pattern.permute.xlu0 0
      %259 = vperm.xlu0 %258, %v161
      %v260 = vpop.permute.xlu0 %259
      %v263 = vlaneseq
      %v264 = vshrl.u32 %v263, 7
      %v265 = vsub.s32 0, %v264
      %v266 = vrot.slane %v178, %v265
      %v268 = vsub.f32 %v185, %v266
      %v269 = vsub.f32 %v190, %v266
      %v270 = vsub.f32 %v195, %v266
      %v271 = vsub.f32 %v200, %v266
      %v272 = vsub.f32 %v205, %v266
      %v273 = vsub.f32 %v210, %v266
      %v274 = vsub.f32 %v215, %v266
      %v275 = vsub.f32 %v220, %v266
      %v276 = vsub.f32 %v225, %v266
      %v277 = vsub.f32 %v230, %v266
      %v278 = vsub.f32 %v235, %v266
      %v279 = vsub.f32 %v240, %v266
      %v280 = vsub.f32 %v245, %v266
      %v281 = vsub.f32 %v250, %v266
      %v282 = vsub.f32 %v255, %v266
      %v283 = vsub.f32 %v260, %v266
      %v284 = vstv %s181
      %v285 = vmul.f32 %v268, %v284
      %v286 = vmul.f32 %v269, %v284
      %v287 = vmul.f32 %v270, %v284
      %v288 = vmul.f32 %v271, %v284
      %v289 = vmul.f32 %v272, %v284
      %v290 = vmul.f32 %v273, %v284
      %v291 = vmul.f32 %v274, %v284
      %v292 = vmul.f32 %v275, %v284
      %v293 = vmul.f32 %v276, %v284
      %v294 = vmul.f32 %v277, %v284
      %v295 = vmul.f32 %v278, %v284
      %v296 = vmul.f32 %v279, %v284
      %v297 = vmul.f32 %v280, %v284
      %v298 = vmul.f32 %v281, %v284
      %v299 = vmul.f32 %v282, %v284
      %v300 = vmul.f32 %v283, %v284
      %v301 = vand.u32 2147483647, %v285
      %v302 = vand.u32 2147483647, %v286
      %v303 = vand.u32 2147483647, %v287
      %v304 = vand.u32 2147483647, %v288
      %v305 = vand.u32 2147483647, %v289
      %v306 = vand.u32 2147483647, %v290
      %v307 = vand.u32 2147483647, %v291
      %v308 = vand.u32 2147483647, %v292
      %v309 = vand.u32 2147483647, %v293
      %v310 = vand.u32 2147483647, %v294
      %v311 = vand.u32 2147483647, %v295
      %v312 = vand.u32 2147483647, %v296
      %v313 = vand.u32 2147483647, %v297
      %v314 = vand.u32 2147483647, %v298
      %v315 = vand.u32 2147483647, %v299
      %v316 = vand.u32 2147483647, %v300
      %v317 = vsub.f32 0.0, %v301
      %v318 = vsub.f32 0.0, %v302
      %v319 = vsub.f32 0.0, %v303
      %v320 = vsub.f32 0.0, %v304
      %v321 = vsub.f32 0.0, %v305
      %v322 = vsub.f32 0.0, %v306
      %v323 = vsub.f32 0.0, %v307
      %v324 = vsub.f32 0.0, %v308
      %v325 = vsub.f32 0.0, %v309
      %v326 = vsub.f32 0.0, %v310
      %v327 = vsub.f32 0.0, %v311
      %v328 = vsub.f32 0.0, %v312
      %v329 = vsub.f32 0.0, %v313
      %v330 = vsub.f32 0.0, %v314
      %v331 = vsub.f32 0.0, %v315
      %v332 = vsub.f32 0.0, %v316
      %v333 = vmul.f32 %v317, 1.442695
      %v334 = vpow.pop %v333
      %v335 = vmul.f32 %v318, 1.442695
      %v336 = vpow.pop %v335
      %v337 = vmul.f32 %v319, 1.442695
      %v338 = vpow.pop %v337
      %v339 = vmul.f32 %v320, 1.442695
      %v340 = vpow.pop %v339
      %v341 = vmul.f32 %v321, 1.442695
      %v342 = vpow.pop %v341
      %v343 = vmul.f32 %v322, 1.442695
      %v344 = vpow.pop %v343
      %v345 = vmul.f32 %v323, 1.442695
      %v346 = vpow.pop %v345
      %v347 = vmul.f32 %v324, 1.442695
      %v348 = vpow.pop %v347
      %v349 = vmul.f32 %v325, 1.442695
      %v350 = vpow.pop %v349
      %v351 = vmul.f32 %v326, 1.442695
      %v352 = vpow.pop %v351
      %v353 = vmul.f32 %v327, 1.442695
      %v354 = vpow.pop %v353
      %v355 = vmul.f32 %v328, 1.442695
      %v356 = vpow.pop %v355
      %v357 = vmul.f32 %v329, 1.442695
      %v358 = vpow.pop %v357
      %v359 = vmul.f32 %v330, 1.442695
      %v360 = vpow.pop %v359
      %v361 = vmul.f32 %v331, 1.442695
      %v362 = vpow.pop %v361
      %v363 = vmul.f32 %v332, 1.442695
      %v364 = vpow.pop %v363
      %v365 = vadd.f32 %v334, 1.0
      %v366 = vlog2.pop %v365
      %v367 = vmul.f32 %v366, 0.6931472
      %v368 = vmul.f32 -0.5, %v334
      %v369 = vadd.f32 %v368, 1.0
      %v370 = vmul.f32 %v369, %v334
      %v371 = vand.u32 2147483647, %v334
      %vm372 = vcmp.lt.f32.partialorder %v371, 0.0004427343
      %v373 = vsel %vm372, %v370, %v367
      %v374 = vadd.f32 %v336, 1.0
      %v375 = vlog2.pop %v374
      %v376 = vmul.f32 %v375, 0.6931472
      %v377 = vmul.f32 -0.5, %v336
      %v378 = vadd.f32 %v377, 1.0
      %v379 = vmul.f32 %v378, %v336
      %v380 = vand.u32 2147483647, %v336
      %vm381 = vcmp.lt.f32.partialorder %v380, 0.0004427343
      %v382 = vsel %vm381, %v379, %v376
      %v383 = vadd.f32 %v338, 1.0
      %v384 = vlog2.pop %v383
      %v385 = vmul.f32 %v384, 0.6931472
      %v386 = vmul.f32 -0.5, %v338
      %v387 = vadd.f32 %v386, 1.0
      %v388 = vmul.f32 %v387, %v338
      %v389 = vand.u32 2147483647, %v338
      %vm390 = vcmp.lt.f32.partialorder %v389, 0.0004427343
      %v391 = vsel %vm390, %v388, %v385
      %v392 = vadd.f32 %v340, 1.0
      %v393 = vlog2.pop %v392
      %v394 = vmul.f32 %v393, 0.6931472
      %v395 = vmul.f32 -0.5, %v340
      %v396 = vadd.f32 %v395, 1.0
      %v397 = vmul.f32 %v396, %v340
      %v398 = vand.u32 2147483647, %v340
      %vm399 = vcmp.lt.f32.partialorder %v398, 0.0004427343
      %v400 = vsel %vm399, %v397, %v394
      %v401 = vadd.f32 %v342, 1.0
      %v402 = vlog2.pop %v401
      %v403 = vmul.f32 %v402, 0.6931472
      %v404 = vmul.f32 -0.5, %v342
      %v405 = vadd.f32 %v404, 1.0
      %v406 = vmul.f32 %v405, %v342
      %v407 = vand.u32 2147483647, %v342
      %vm408 = vcmp.lt.f32.partialorder %v407, 0.0004427343
      %v409 = vsel %vm408, %v406, %v403
      %v410 = vadd.f32 %v344, 1.0
      %v411 = vlog2.pop %v410
      %v412 = vmul.f32 %v411, 0.6931472
      %v413 = vmul.f32 -0.5, %v344
      %v414 = vadd.f32 %v413, 1.0
      %v415 = vmul.f32 %v414, %v344
      %v416 = vand.u32 2147483647, %v344
      %vm417 = vcmp.lt.f32.partialorder %v416, 0.0004427343
      %v418 = vsel %vm417, %v415, %v412
      %v419 = vadd.f32 %v346, 1.0
      %v420 = vlog2.pop %v419
      %v421 = vmul.f32 %v420, 0.6931472
      %v422 = vmul.f32 -0.5, %v346
      %v423 = vadd.f32 %v422, 1.0
      %v424 = vmul.f32 %v423, %v346
      %v425 = vand.u32 2147483647, %v346
      %vm426 = vcmp.lt.f32.partialorder %v425, 0.0004427343
      %v427 = vsel %vm426, %v424, %v421
      %v428 = vadd.f32 %v348, 1.0
      %v429 = vlog2.pop %v428
      %v430 = vmul.f32 %v429, 0.6931472
      %v431 = vmul.f32 -0.5, %v348
      %v432 = vadd.f32 %v431, 1.0
      %v433 = vmul.f32 %v432, %v348
      %v434 = vand.u32 2147483647, %v348
      %vm435 = vcmp.lt.f32.partialorder %v434, 0.0004427343
      %v436 = vsel %vm435, %v433, %v430
      %v437 = vadd.f32 %v350, 1.0
      %v438 = vlog2.pop %v437
      %v439 = vmul.f32 %v438, 0.6931472
      %v440 = vmul.f32 -0.5, %v350
      %v441 = vadd.f32 %v440, 1.0
      %v442 = vmul.f32 %v441, %v350
      %v443 = vand.u32 2147483647, %v350
      %vm444 = vcmp.lt.f32.partialorder %v443, 0.0004427343
      %v445 = vsel %vm444, %v442, %v439
      %v446 = vadd.f32 %v352, 1.0
      %v447 = vlog2.pop %v446
      %v448 = vmul.f32 %v447, 0.6931472
      %v449 = vmul.f32 -0.5, %v352
      %v450 = vadd.f32 %v449, 1.0
      %v451 = vmul.f32 %v450, %v352
      %v452 = vand.u32 2147483647, %v352
      %vm453 = vcmp.lt.f32.partialorder %v452, 0.0004427343
      %v454 = vsel %vm453, %v451, %v448
      %v455 = vadd.f32 %v354, 1.0
      %v456 = vlog2.pop %v455
      %v457 = vmul.f32 %v456, 0.6931472
      %v458 = vmul.f32 -0.5, %v354
      %v459 = vadd.f32 %v458, 1.0
      %v460 = vmul.f32 %v459, %v354
      %v461 = vand.u32 2147483647, %v354
      %vm462 = vcmp.lt.f32.partialorder %v461, 0.0004427343
      %v463 = vsel %vm462, %v460, %v457
      %v464 = vadd.f32 %v356, 1.0
      %v465 = vlog2.pop %v464
      %v466 = vmul.f32 %v465, 0.6931472
      %v467 = vmul.f32 -0.5, %v356
      %v468 = vadd.f32 %v467, 1.0
      %v469 = vmul.f32 %v468, %v356
      %v470 = vand.u32 2147483647, %v356
      %vm471 = vcmp.lt.f32.partialorder %v470, 0.0004427343
      %v472 = vsel %vm471, %v469, %v466
      %v473 = vadd.f32 %v358, 1.0
      %v474 = vlog2.pop %v473
      %v475 = vmul.f32 %v474, 0.6931472
      %v476 = vmul.f32 -0.5, %v358
      %v477 = vadd.f32 %v476, 1.0
      %v478 = vmul.f32 %v477, %v358
      %v479 = vand.u32 2147483647, %v358
      %vm480 = vcmp.lt.f32.partialorder %v479, 0.0004427343
      %v481 = vsel %vm480, %v478, %v475
      %v482 = vadd.f32 %v360, 1.0
      %v483 = vlog2.pop %v482
      %v484 = vmul.f32 %v483, 0.6931472
      %v485 = vmul.f32 -0.5, %v360
      %v486 = vadd.f32 %v485, 1.0
      %v487 = vmul.f32 %v486, %v360
      %v488 = vand.u32 2147483647, %v360
      %vm489 = vcmp.lt.f32.partialorder %v488, 0.0004427343
      %v490 = vsel %vm489, %v487, %v484
      %v491 = vadd.f32 %v362, 1.0
      %v492 = vlog2.pop %v491
      %v493 = vmul.f32 %v492, 0.6931472
      %v494 = vmul.f32 -0.5, %v362
      %v495 = vadd.f32 %v494, 1.0
      %v496 = vmul.f32 %v495, %v362
      %v497 = vand.u32 2147483647, %v362
      %vm498 = vcmp.lt.f32.partialorder %v497, 0.0004427343
      %v499 = vsel %vm498, %v496, %v493
      %v500 = vadd.f32 %v364, 1.0
      %v501 = vlog2.pop %v500
      %v502 = vmul.f32 %v501, 0.6931472
      %v503 = vmul.f32 -0.5, %v364
      %v504 = vadd.f32 %v503, 1.0
      %v505 = vmul.f32 %v504, %v364
      %v506 = vand.u32 2147483647, %v364
      %vm507 = vcmp.lt.f32.partialorder %v506, 0.0004427343
      %v508 = vsel %vm507, %v505, %v502
      %v509 = vmin.f32 %v285, 0.0
      %v510 = vmin.f32 %v286, 0.0
      %v511 = vmin.f32 %v287, 0.0
      %v512 = vmin.f32 %v288, 0.0
      %v513 = vmin.f32 %v289, 0.0
      %v514 = vmin.f32 %v290, 0.0
      %v515 = vmin.f32 %v291, 0.0
      %v516 = vmin.f32 %v292, 0.0
      %v517 = vmin.f32 %v293, 0.0
      %v518 = vmin.f32 %v294, 0.0
      %v519 = vmin.f32 %v295, 0.0
      %v520 = vmin.f32 %v296, 0.0
      %v521 = vmin.f32 %v297, 0.0
      %v522 = vmin.f32 %v298, 0.0
      %v523 = vmin.f32 %v299, 0.0
      %v524 = vmin.f32 %v300, 0.0
      %v525 = vsub.f32 %v373, %v509
      %v526 = vsub.f32 %v382, %v510
      %v527 = vsub.f32 %v391, %v511
      %v528 = vsub.f32 %v400, %v512
      %v529 = vsub.f32 %v409, %v513
      %v530 = vsub.f32 %v418, %v514
      %v531 = vsub.f32 %v427, %v515
      %v532 = vsub.f32 %v436, %v516
      %v533 = vsub.f32 %v445, %v517
      %v534 = vsub.f32 %v454, %v518
      %v535 = vsub.f32 %v463, %v519
      %v536 = vsub.f32 %v472, %v520
      %v537 = vsub.f32 %v481, %v521
      %v538 = vsub.f32 %v490, %v522
      %v539 = vsub.f32 %v499, %v523
      %v540 = vsub.f32 %v508, %v524
      %v541 = vlaneseq
      %v542 = vshrl.u32 %v541, 7
      %v543 = vadd.s32 %v542, 8
      %v544 = vadd.s32 %v542, 16
      %v545 = vadd.s32 %v542, 24
      %v546 = vadd.s32 %v542, 32
      %v547 = vadd.s32 %v542, 40
      %v548 = vadd.s32 %v542, 48
      %v549 = vadd.s32 %v542, 56
      %v550 = vadd.s32 %v542, 64
      %v551 = vadd.s32 %v542, 72
      %v552 = vadd.s32 %v542, 80
      %v553 = vadd.s32 %v542, 88
      %v554 = vadd.s32 %v542, 96
      %v555 = vadd.s32 %v542, 104
      %v556 = vadd.s32 %v542, 112
      %v557 = vadd.s32 %v542, 120
      %v558 = vlaneseq
      %v559 = vand.u32 %v558, 127
      %560 = vset.pattern.permute.xlu0 0
      %561 = vperm.xlu0 %560, %v162
      %v562 = vpop.permute.xlu0 %561
      %563 = vset.pattern.permute.xlu0 0
      %564 = vperm.xlu0 %563, %v163
      %v565 = vpop.permute.xlu0 %564
      %566 = vset.pattern.permute.xlu0 0
      %567 = vperm.xlu0 %566, %v164
      %v568 = vpop.permute.xlu0 %567
      %569 = vset.pattern.permute.xlu0 0
      %570 = vperm.xlu0 %569, %v165
      %v571 = vpop.permute.xlu0 %570
      %572 = vset.pattern.permute.xlu0 0
      %573 = vperm.xlu0 %572, %v166
      %v574 = vpop.permute.xlu0 %573
      %575 = vset.pattern.permute.xlu0 0
      %576 = vperm.xlu0 %575, %v167
      %v577 = vpop.permute.xlu0 %576
      %578 = vset.pattern.permute.xlu0 0
      %579 = vperm.xlu0 %578, %v168
      %v580 = vpop.permute.xlu0 %579
      %581 = vset.pattern.permute.xlu0 0
      %582 = vperm.xlu0 %581, %v169
      %v583 = vpop.permute.xlu0 %582
      %584 = vset.pattern.permute.xlu0 0
      %585 = vperm.xlu0 %584, %v170
      %v586 = vpop.permute.xlu0 %585
      %587 = vset.pattern.permute.xlu0 0
      %588 = vperm.xlu0 %587, %v171
      %v589 = vpop.permute.xlu0 %588
      %590 = vset.pattern.permute.xlu0 0
      %591 = vperm.xlu0 %590, %v172
      %v592 = vpop.permute.xlu0 %591
      %593 = vset.pattern.permute.xlu0 0
      %594 = vperm.xlu0 %593, %v173
      %v595 = vpop.permute.xlu0 %594
      %596 = vset.pattern.permute.xlu0 0
      %597 = vperm.xlu0 %596, %v174
      %v598 = vpop.permute.xlu0 %597
      %599 = vset.pattern.permute.xlu0 0
      %600 = vperm.xlu0 %599, %v175
      %v601 = vpop.permute.xlu0 %600
      %602 = vset.pattern.permute.xlu0 0
      %603 = vperm.xlu0 %602, %v176
      %v604 = vpop.permute.xlu0 %603
      %605 = vset.pattern.permute.xlu0 0
      %606 = vperm.xlu0 %605, %v177
      %v607 = vpop.permute.xlu0 %606
      %v608 = vlaneseq
      %v609 = vshrl.u32 %v608, 7
      %v610 = vsub.s32 0, %v609
      %v611 = vrot.slane %v179, %v610
      %vm612 = vcmp.eq.s32.totalorder %v562, %v611
      %vm613 = vcmp.eq.s32.totalorder %v565, %v611
      %vm614 = vcmp.eq.s32.totalorder %v568, %v611
      %vm615 = vcmp.eq.s32.totalorder %v571, %v611
      %vm616 = vcmp.eq.s32.totalorder %v574, %v611
      %vm617 = vcmp.eq.s32.totalorder %v577, %v611
      %vm618 = vcmp.eq.s32.totalorder %v580, %v611
      %vm619 = vcmp.eq.s32.totalorder %v583, %v611
      %vm620 = vcmp.eq.s32.totalorder %v586, %v611
      %vm621 = vcmp.eq.s32.totalorder %v589, %v611
      %vm622 = vcmp.eq.s32.totalorder %v592, %v611
      %vm623 = vcmp.eq.s32.totalorder %v595, %v611
      %vm624 = vcmp.eq.s32.totalorder %v598, %v611
      %vm625 = vcmp.eq.s32.totalorder %v601, %v611
      %vm626 = vcmp.eq.s32.totalorder %v604, %v611
      %vm627 = vcmp.eq.s32.totalorder %v607, %v611
      %s628 = smul.u32 0, 128
      %s629 = ssub.s32 8, %s628
      %v630 = vstv %s629
      %vm631 = vcmp.lt.s32.totalorder %v542, %v630
      %vm632 = vcmp.lt.s32.totalorder %v543, %v630
      %vm633 = vcmp.lt.s32.totalorder %v544, %v630
      %vm634 = vcmp.lt.s32.totalorder %v545, %v630
      %vm635 = vcmp.lt.s32.totalorder %v546, %v630
      %vm636 = vcmp.lt.s32.totalorder %v547, %v630
      %vm637 = vcmp.lt.s32.totalorder %v548, %v630
      %vm638 = vcmp.lt.s32.totalorder %v549, %v630
      %vm639 = vcmp.lt.s32.totalorder %v550, %v630
      %vm640 = vcmp.lt.s32.totalorder %v551, %v630
      %vm641 = vcmp.lt.s32.totalorder %v552, %v630
      %vm642 = vcmp.lt.s32.totalorder %v553, %v630
      %vm643 = vcmp.lt.s32.totalorder %v554, %v630
      %vm644 = vcmp.lt.s32.totalorder %v555, %v630
      %vm645 = vcmp.lt.s32.totalorder %v556, %v630
      %vm646 = vcmp.lt.s32.totalorder %v557, %v630
      %vm647 = vmand %vm612, %vm631
      %vm648 = vmand %vm613, %vm632
      %vm649 = vmand %vm614, %vm633
      %vm650 = vmand %vm615, %vm634
      %vm651 = vmand %vm616, %vm635
      %vm652 = vmand %vm617, %vm636
      %vm653 = vmand %vm618, %vm637
      %vm654 = vmand %vm619, %vm638
      %vm655 = vmand %vm620, %vm639
      %vm656 = vmand %vm621, %vm640
      %vm657 = vmand %vm622, %vm641
      %vm658 = vmand %vm623, %vm642
      %vm659 = vmand %vm624, %vm643
      %vm660 = vmand %vm625, %vm644
      %vm661 = vmand %vm626, %vm645
      %vm662 = vmand %vm627, %vm646
      %vm663 = vcmp.lt.s32.totalorder %v559, 8
      %vm664 = vmand %vm647, %vm663
      %vm665 = vmand %vm648, %vm663
      %vm666 = vmand %vm649, %vm663
      %vm667 = vmand %vm650, %vm663
      %vm668 = vmand %vm651, %vm663
      %vm669 = vmand %vm652, %vm663
      %vm670 = vmand %vm653, %vm663
      %vm671 = vmand %vm654, %vm663
      %vm672 = vmand %vm655, %vm663
      %vm673 = vmand %vm656, %vm663
      %vm674 = vmand %vm657, %vm663
      %vm675 = vmand %vm658, %vm663
      %vm676 = vmand %vm659, %vm663
      %vm677 = vmand %vm660, %vm663
      %vm678 = vmand %vm661, %vm663
      %vm679 = vmand %vm662, %vm663
      %p680 = scmp.ne.s32.totalorder 0, 0
      %vm681 = vcmp.lt.s32.totalorder %v542, %v559
      %vm682 = vcmp.lt.s32.totalorder %v543, %v559
      %vm683 = vcmp.lt.s32.totalorder %v544, %v559
      %vm684 = vcmp.lt.s32.totalorder %v545, %v559
      %vm685 = vcmp.lt.s32.totalorder %v546, %v559
      %vm686 = vcmp.lt.s32.totalorder %v547, %v559
      %vm687 = vcmp.lt.s32.totalorder %v548, %v559
      %vm688 = vcmp.lt.s32.totalorder %v549, %v559
      %vm689 = vcmp.lt.s32.totalorder %v550, %v559
      %vm690 = vcmp.lt.s32.totalorder %v551, %v559
      %vm691 = vcmp.lt.s32.totalorder %v552, %v559
      %vm692 = vcmp.lt.s32.totalorder %v553, %v559
      %vm693 = vcmp.lt.s32.totalorder %v554, %v559
      %vm694 = vcmp.lt.s32.totalorder %v555, %v559
      %vm695 = vcmp.lt.s32.totalorder %v556, %v559
      %vm696 = vcmp.lt.s32.totalorder %v557, %v559
      %s697 = scalar_select %p680, 1, 0
      %v698 = vstv %s697
      %vm699 = vcmp.eq.s32.totalorder %v698, 1
      %vm700 = vmor %vm699, %vm681
      %vm701 = vmor %vm699, %vm682
      %vm702 = vmor %vm699, %vm683
      %vm703 = vmor %vm699, %vm684
      %vm704 = vmor %vm699, %vm685
      %vm705 = vmor %vm699, %vm686
      %vm706 = vmor %vm699, %vm687
      %vm707 = vmor %vm699, %vm688
      %vm708 = vmor %vm699, %vm689
      %vm709 = vmor %vm699, %vm690
      %vm710 = vmor %vm699, %vm691
      %vm711 = vmor %vm699, %vm692
      %vm712 = vmor %vm699, %vm693
      %vm713 = vmor %vm699, %vm694
      %vm714 = vmor %vm699, %vm695
      %vm715 = vmor %vm699, %vm696
      %vm716 = vmand %vm664, %vm700
      %vm717 = vmand %vm665, %vm701
      %vm718 = vmand %vm666, %vm702
      %vm719 = vmand %vm667, %vm703
      %vm720 = vmand %vm668, %vm704
      %vm721 = vmand %vm669, %vm705
      %vm722 = vmand %vm670, %vm706
      %vm723 = vmand %vm671, %vm707
      %vm724 = vmand %vm672, %vm708
      %vm725 = vmand %vm673, %vm709
      %vm726 = vmand %vm674, %vm710
      %vm727 = vmand %vm675, %vm711
      %vm728 = vmand %vm676, %vm712
      %vm729 = vmand %vm677, %vm713
      %vm730 = vmand %vm678, %vm714
      %vm731 = vmand %vm679, %vm715
      %v732 = vsel %vm716, %v525, 0.0
      %v733 = vsel %vm717, %v526, 0.0
      %v734 = vsel %vm718, %v527, 0.0
      %v735 = vsel %vm719, %v528, 0.0
      %v736 = vsel %vm720, %v529, 0.0
      %v737 = vsel %vm721, %v530, 0.0
      %v738 = vsel %vm722, %v531, 0.0
      %v739 = vsel %vm723, %v532, 0.0
      %v740 = vsel %vm724, %v533, 0.0
      %v741 = vsel %vm725, %v534, 0.0
      %v742 = vsel %vm726, %v535, 0.0
      %v743 = vsel %vm727, %v536, 0.0
      %v744 = vsel %vm728, %v537, 0.0
      %v745 = vsel %vm729, %v538, 0.0
      %v746 = vsel %vm730, %v539, 0.0
      %v747 = vsel %vm731, %v540, 0.0
      %v748 = vadd.f32 %v732, %v733
      %v749 = vadd.f32 %v748, %v734
      %v750 = vadd.f32 %v749, %v735
      %v751 = vadd.f32 %v750, %v736
      %v752 = vadd.f32 %v751, %v737
      %v753 = vadd.f32 %v752, %v738
      %v754 = vadd.f32 %v753, %v739
      %v755 = vadd.f32 %v754, %v740
      %v756 = vadd.f32 %v755, %v741
      %v757 = vadd.f32 %v756, %v742
      %v758 = vadd.f32 %v757, %v743
      %v759 = vadd.f32 %v758, %v744
      %v760 = vadd.f32 %v759, %v745
      %v761 = vadd.f32 %v760, %v746
      %v762 = vadd.f32 %v761, %v747
      %v763 = vrot.slane %v762, 4
      %v764 = vadd.f32 %v762, %v763
      %v765 = vrot.slane %v764, 2
      %v766 = vadd.f32 %v764, %v765
      %v767 = vrot.slane %v766, 1
      %v768 = vadd.f32 %v766, %v767
      %v769 = vld [vmem:[#allocation7] sm:$0x1]
      %v770 = vadd.f32 %v769, %v768
      %771 = vst [vmem:[#allocation7] sm:$0x1] %v770
    $region25: #{tpu_custom_call.1} parent=1 // pred_fallthru
      _
    // Predicated region
    $region26: #{tpu_custom_call.1} parent=1 // pred_check
      _
    $region27: #{tpu_custom_call.1} parent=1 // pred_check_branch
      %773 = sbr.rel (0) target = $region29
    $region28: #{tpu_custom_call.1} parent=1 // pred_region
      %s775 = ssub.s32 16, 16
      %776 = vsyncadd [#allocation8], %s775
      %s778 = sshll.u32 [#allocation7], 4
      %s779 = int_to_ptr.vmem [resolvable:$true] %s778
      %781 = dma.vmem_to_hbm [thread:$0]  %s779, 16, %s6, [#allocation8]
    $region29: #{tpu_custom_call.1} parent=1 // pred_fallthru
      _
    // Predicated region
    $region30: #{tpu_custom_call.1} parent=1 // pred_check
      _
    $region31: #{tpu_custom_call.1} parent=1 // pred_check_branch
      %783 = sbr.rel (0) target = $region33
    $region32: #{tpu_custom_call.1} parent=1 // pred_region
      %784 = dma.done [#allocation8], 16
    $region33: #{tpu_custom_call.1} parent=1 // pred_fallthru
      _
    %785 = vsyncpa [#allocation8], 1

</llo_original>
